<compile_context>
chip_gen: v6e
topology: v6e:2x2x1
jax: 0.10.0
libtpu: 0.0.40
codegen_flags: <defaults>
</compile_context>

<pallas_src>
import functools

import jax
import jax.numpy as jnp
from jax import lax
from jax.experimental import pallas as pl
from jax.experimental.pallas import tpu as pltpu

LANE = 128             # lane width: last dim of every block
MAX_BLOCK_ROWS = 1024  # 1024 x 128 f32 = 512 KiB per input block


def _bce_with_logits(x, t):
    # Numerically stable, matches torch.nn.BCEWithLogitsLoss(reduction='none'):
    #   loss = max(x, 0) - x*t + log(1 + exp(-|x|))
    return jnp.maximum(x, 0.0) - x * t + jnp.log1p(jnp.exp(-jnp.abs(x)))


# ---------------------------------------------------------------------------
# Reduction path ('mean' / 'sum'): each grid step emits an (8,128) f32 partial.
# ---------------------------------------------------------------------------
def _masked_bce_partial_kernel(x_ref, t_ref, m_ref, out_ref, *,
                               block_rows, total_rows, need_row_mask):
    x = x_ref[...].astype(jnp.float32)
    t = t_ref[...].astype(jnp.float32)
    m = m_ref[...].astype(jnp.float32)
    loss = m * _bce_with_logits(x, t)

    if need_row_mask:
        # Ragged last block: rows >= total_rows were never in the array (reads
        # of undefined block padding) -> select them to 0 before accumulating.
        rows_left = total_rows - pl.program_id(0) * block_rows
        row_ids = lax.broadcasted_iota(jnp.int32, (block_rows, LANE), 0)
        loss = jnp.where(row_ids < rows_left, loss, 0.0)

    # (block_rows,128) -> (8,128) partial: plain VPU vreg adds (the reshape is a
    # no-op layout-wise: consecutive (8,128) vregs).  Final cross-lane reduce
    # happens once, outside the kernel, on a tiny array.
    out_ref[...] = jnp.sum(loss.reshape(block_rows // 8, 8, LANE), axis=0)


# ---------------------------------------------------------------------------
# Elementwise path (reduction='none'): masked per-element loss, native dtype out.
# ---------------------------------------------------------------------------
def _masked_bce_elem_kernel(x_ref, t_ref, m_ref, out_ref):
    x = x_ref[...].astype(jnp.float32)
    t = t_ref[...].astype(jnp.float32)
    m = m_ref[...].astype(jnp.float32)
    out_ref[...] = (m * _bce_with_logits(x, t)).astype(out_ref.dtype)


def _round_up(n, m):
    return ((n + m - 1) // m) * m


def _flatten_to_rows(a):
    """Flatten (free for contiguous arrays) to (R, 128) in the NATIVE dtype.

    Only pads the tail when numel is not a multiple of 128 (pad value 0; the
    mask is padded with 0 as well, so padding never contributes to the loss).
    """
    flat = a.reshape(-1)
    n = flat.shape[0]
    padded = _round_up(n, LANE)
    if padded != n:
        flat = jnp.pad(flat, (0, padded - n))
    return flat.reshape(padded // LANE, LANE)


def masked_bce_with_logits_loss(input_, target, class_masks, reduction="mean"):
    """JAX/Pallas equivalent of MaskedBCEWithLogitsLoss(weight=None, reduction)."""
    orig_shape = input_.shape
    numel = int(input_.size)

    x2d = _flatten_to_rows(input_)
    t2d = _flatten_to_rows(target)
    m2d = _flatten_to_rows(class_masks)

    R = x2d.shape[0]
    # Largest multiple-of-8 row block, capped at MAX_BLOCK_ROWS.  Rounding UP
    # means small inputs are covered by a single grid step.
    block_rows = min(MAX_BLOCK_ROWS, _round_up(R, 8))
    num_blocks = pl.cdiv(R, block_rows)
    grid = (num_blocks,)
    in_specs = [pl.BlockSpec((block_rows, LANE), lambda i: (i, 0))
                for _ in range(3)]

    if reduction == "none":
        out = pl.pallas_call(
            _masked_bce_elem_kernel,
            out_shape=jax.ShapeDtypeStruct((R, LANE), input_.dtype),
            grid_spec=pltpu.PrefetchScalarGridSpec(
                num_scalar_prefetch=0,
                grid=grid,
                in_specs=in_specs,
                out_specs=pl.BlockSpec((block_rows, LANE), lambda i: (i, 0)),
            ),
            compiler_params=pltpu.CompilerParams(
                dimension_semantics=("parallel",)),
        )(x2d, t2d, m2d)
        flat = out.reshape(-1)
        if flat.shape[0] != numel:
            flat = flat[:numel]
        return flat.reshape(orig_shape)

    if reduction == "mean":
        inv_denom = 1.0 / float(numel)
    elif reduction == "sum":
        inv_denom = 1.0
    else:
        raise ValueError(f"unsupported reduction: {reduction}")

    kernel = functools.partial(
        _masked_bce_partial_kernel,
        block_rows=block_rows,
        total_rows=R,
        need_row_mask=(R % block_rows != 0),
    )
    partials = pl.pallas_call(
        kernel,
        out_shape=jax.ShapeDtypeStruct((num_blocks * 8, LANE), jnp.float32),
        grid_spec=pltpu.PrefetchScalarGridSpec(
            num_scalar_prefetch=0,
            grid=grid,
            in_specs=in_specs,
            out_specs=pl.BlockSpec((8, LANE), lambda i: (i, 0)),
        ),
        compiler_params=pltpu.CompilerParams(
            dimension_semantics=("parallel",)),
    )(x2d, t2d, m2d)

    # Tiny final reduce + scale in XLA (a few KiB), keeps the kernel fully parallel.
    result = jnp.sum(partials) * jnp.float32(inv_denom)
    return result.astype(input_.dtype)


if __name__ == "__main__":
    key = jax.random.PRNGKey(0)
    k1, k2, k3 = jax.random.split(key, 3)

    def ref_bce(x, t):
        return jnp.maximum(x, 0.0) - x * t + jnp.log1p(jnp.exp(-jnp.abs(x)))

    # Default module behavior: weight=None, reduction='mean', NCHW input.
    shape = (2, 4, 16, 16)
    x = jax.random.normal(k1, shape, dtype=jnp.float32)
    target = (jax.random.uniform(k2, shape) > 0.5).astype(jnp.float32)
    class_masks = (jax.random.uniform(k3, shape) > 0.3).astype(jnp.float32)

    loss = jax.block_until_ready(
        masked_bce_with_logits_loss(x, target, class_masks, reduction="mean"))
    ref = jnp.mean(class_masks * ref_bce(x, target))
    assert jnp.allclose(loss, ref, atol=1e-5, rtol=1e-5), (loss, ref)

    loss_sum = jax.block_until_ready(
        masked_bce_with_logits_loss(x, target, class_masks, reduction="sum"))
    ref_sum = jnp.sum(class_masks * ref_bce(x, target))
    assert jnp.allclose(loss_sum, ref_sum, atol=1e-4, rtol=1e-5), (loss_sum, ref_sum)

    loss_none = jax.block_until_ready(
        masked_bce_with_logits_loss(x, target, class_masks, reduction="none"))
    assert loss_none.shape == shape
    assert jnp.allclose(loss_none, class_masks * ref_bce(x, target),
                        atol=1e-5, rtol=1e-5)

    # Ragged shape: numel not a multiple of 128 -> exercises lane padding and the
    # ragged-row in-kernel mask (single grid step covers the whole tensor).
    shape2 = (3, 5, 7, 11)
    k4, k5, k6 = jax.random.split(jax.random.PRNGKey(1), 3)
    x2 = jax.random.normal(k4, shape2, dtype=jnp.float32)
    t2 = (jax.random.uniform(k5, shape2) > 0.5).astype(jnp.float32)
    m2 = (jax.random.uniform(k6, shape2) > 0.3).astype(jnp.float32)

    loss2 = jax.block_until_ready(
        masked_bce_with_logits_loss(x2, t2, m2, reduction="mean"))
    ref2 = jnp.mean(m2 * ref_bce(x2, t2))
    assert jnp.allclose(loss2, ref2, atol=1e-5, rtol=1e-5), (loss2, ref2)

    loss2_none = jax.block_until_ready(
        masked_bce_with_logits_loss(x2, t2, m2, reduction="none"))
    assert loss2_none.shape == shape2
    assert jnp.allclose(loss2_none, m2 * ref_bce(x2, t2), atol=1e-5, rtol=1e-5)

    # bf16 input exercises the native-dtype HBM path (f32 cast happens in-kernel).
    xb = x.astype(jnp.bfloat16)
    loss_b = jax.block_until_ready(
        masked_bce_with_logits_loss(xb, target, class_masks, reduction="mean"))
    ref_b = jnp.mean(class_masks * ref_bce(xb.astype(jnp.float32), target))
    assert jnp.allclose(loss_b.astype(jnp.float32), ref_b, atol=1e-2, rtol=1e-2)

    print("KERNEL_OK")
</pallas_src>

<mosaic_0001>
module attributes {stable_mosaic.version = 11 : i64} {
  func.func @_masked_bce_partial_kernel(%arg0: i32, %arg1: memref<16x128xf32, #tpu.memory_space<vmem>>, %arg2: memref<16x128xf32, #tpu.memory_space<vmem>>, %arg3: memref<16x128xf32, #tpu.memory_space<vmem>>, %arg4: memref<8x128xf32, #tpu.memory_space<vmem>>) attributes {dimension_semantics = [#tpu.dimension_semantics<parallel>], iteration_bounds = array<i64: 1>, scalar_prefetch = 0 : i64, scratch_operands = 0 : i64, tpu.core_type = #tpu.core_type<tc>, window_params = [{transform_indices = @transform_0, window_bounds = array<i64: 16, 128>}, {transform_indices = @transform_1, window_bounds = array<i64: 16, 128>}, {transform_indices = @transform_2, window_bounds = array<i64: 16, 128>}, {transform_indices = @transform_3, window_bounds = array<i64: 8, 128>}]} {
    %c0 = arith.constant 0 : index
    %c0_0 = arith.constant 0 : index
    %0 = vector.load %arg1[%c0, %c0_0] : memref<16x128xf32, #tpu.memory_space<vmem>>, vector<16x128xf32>
    %c0_1 = arith.constant 0 : index
    %c0_2 = arith.constant 0 : index
    %1 = vector.load %arg2[%c0_1, %c0_2] : memref<16x128xf32, #tpu.memory_space<vmem>>, vector<16x128xf32>
    %c0_3 = arith.constant 0 : index
    %c0_4 = arith.constant 0 : index
    %2 = vector.load %arg3[%c0_3, %c0_4] : memref<16x128xf32, #tpu.memory_space<vmem>>, vector<16x128xf32>
    %cst = arith.constant 0.000000e+00 : f32
    %3 = vector.broadcast %cst : f32 to vector<16x128xf32>
    %4 = arith.maximumf %0, %3 : vector<16x128xf32>
    %5 = arith.mulf %0, %1 : vector<16x128xf32>
    %6 = arith.subf %4, %5 : vector<16x128xf32>
    %7 = math.absf %0 : vector<16x128xf32>
    %cst_5 = arith.constant 0.000000e+00 : f32
    %8 = vector.broadcast %cst_5 : f32 to vector<16x128xf32>
    %9 = arith.subf %8, %7 : vector<16x128xf32>
    %10 = math.exp %9 : vector<16x128xf32>
    %11 = math.log1p %10 : vector<16x128xf32>
    %12 = arith.addf %6, %11 : vector<16x128xf32>
    %13 = arith.mulf %2, %12 : vector<16x128xf32>
    %14 = vector.shape_cast %13 : vector<16x128xf32> to vector<2x8x128xf32>
    %cst_6 = arith.constant dense<0.000000e+00> : vector<8x128xf32>
    %15 = vector.multi_reduction <add>, %14, %cst_6 [0] : vector<2x8x128xf32> to vector<8x128xf32>
    %c0_7 = arith.constant 0 : index
    %c0_8 = arith.constant 0 : index
    %16 = vector.load %arg4[%c0_7, %c0_8] : memref<8x128xf32, #tpu.memory_space<vmem>>, vector<8x128xf32>
    tpu.vector_store %arg4[%c0_7, %c0_8], %15 {strides = array<i32>} : memref<8x128xf32, #tpu.memory_space<vmem>>, vector<8x128xf32>,
    return
  }
  func.func @transform_0(%arg0: i32) -> (i32, i32) {
    %c0_i32 = arith.constant 0 : i32
    %c0_i32_0 = arith.constant 0 : i32
    return %arg0, %c0_i32 : i32, i32
  }
  func.func @transform_1(%arg0: i32) -> (i32, i32) {
    %c0_i32 = arith.constant 0 : i32
    %c0_i32_0 = arith.constant 0 : i32
    return %arg0, %c0_i32 : i32, i32
  }
  func.func @transform_2(%arg0: i32) -> (i32, i32) {
    %c0_i32 = arith.constant 0 : i32
    %c0_i32_0 = arith.constant 0 : i32
    return %arg0, %c0_i32 : i32, i32
  }
  func.func @transform_3(%arg0: i32) -> (i32, i32) {
    %c0_i32 = arith.constant 0 : i32
    %c0_i32_0 = arith.constant 0 : i32
    return %arg0, %c0_i32 : i32, i32
  }
}

</mosaic_0001>

<llo_original>
// kernel: tpu_custom_call.1
$region0: #{tpu_custom_call.1}
  #allocation0 [shape = 'u32[]', space=smem, size = 0x4, offset = 0x4, fixed_abs, tag = 'smem constant byte address 0x4 - core index']
  #allocation1 [shape = 'u32[144,128]{1,0:T(1,128)}', space=vmem, size = 0x12000, scoped, tag = 'internal scratch']
  %s0 = inlined_call_operand.hbm [shape: f32[16,128], index: 0, kind: input, shape index: {}]
  %s1 = inlined_call_operand.hbm [shape: f32[16,128], index: 1, kind: input, shape index: {}]
  %s2 = inlined_call_operand.hbm [shape: f32[16,128], index: 2, kind: input, shape index: {}]
  %s3 = inlined_call_operand.hbm [shape: f32[8,128], index: 3, kind: output, shape index: {}]
  %s4 = sld [smem:[#allocation0]]
  $region34: #{tpu_custom_call.1} parent=0
    _
  %s6 = ssub.s32 1, %s4
  %s7 = scalar_select 0, %s6, %s4
  $region1: #{tpu_custom_call.1} parent=0
    #allocation2 [shape = 'u8[8192]{0}', space=vmem, size = 0x2000, scoped, tag = 'input window, operand 0, single buffered']
    #allocation3 [shape = 's32[1]{0}', space=sflag, size = 0x4, scoped, tag = 'scoped memory for tpu_custom_call.1']
    #allocation4 [shape = 's32[1]{0}', space=sflag, size = 0x4, scoped, tag = 'scoped memory for tpu_custom_call.1']
    #allocation5 [shape = 'u8[8192]{0}', space=vmem, size = 0x2000, scoped, tag = 'input window, operand 1, single buffered']
    #allocation6 [shape = 's32[1]{0}', space=sflag, size = 0x4, scoped, tag = 'scoped memory for tpu_custom_call.1']
    #allocation7 [shape = 'u8[8192]{0}', space=vmem, size = 0x2000, scoped, tag = 'input window, operand 2, single buffered']
    #allocation8 [shape = 'u8[4096]{0}', space=vmem, size = 0x1000, scoped, tag = 'output window, operand 0, single buffered']
    %8 = vsyncpa [#allocation3], 0
    %9 = vsyncpa [#allocation6], 0
    %10 = vsyncpa [#allocation4], 0
    // Predicated region
    $region2: #{tpu_custom_call.1} parent=1 // pred_check
      _
    $region3: #{tpu_custom_call.1} parent=1 // pred_check_branch
      %12 = sbr.rel (0) target = $region5
    $region4: #{tpu_custom_call.1} parent=1 // pred_region
      %s14 = ssub.s32 256, 256
      %15 = vsyncadd [#allocation3], %s14
      %s16 = sshll.u32 [#allocation2], 4
      %s17 = int_to_ptr.vmem [resolvable:$true] %s16
      %22 = dma.hbm_to_vmem [thread:$0]  %s0, 256, %s17, [#allocation3], 128, 128, 8
    $region5: #{tpu_custom_call.1} parent=1 // pred_fallthru
      _
    // Predicated region
    $region6: #{tpu_custom_call.1} parent=1 // pred_check
      _
    $region7: #{tpu_custom_call.1} parent=1 // pred_check_branch
      %24 = sbr.rel (0) target = $region9
    $region8: #{tpu_custom_call.1} parent=1 // pred_region
      %s26 = ssub.s32 256, 256
      %27 = vsyncadd [#allocation6], %s26
      %s28 = sshll.u32 [#allocation5], 4
      %s29 = int_to_ptr.vmem [resolvable:$true] %s28
      %34 = dma.hbm_to_vmem [thread:$0]  %s1, 256, %s29, [#allocation6], 128, 128, 8
    $region9: #{tpu_custom_call.1} parent=1 // pred_fallthru
      _
    // Predicated region
    $region10: #{tpu_custom_call.1} parent=1 // pred_check
      _
    $region11: #{tpu_custom_call.1} parent=1 // pred_check_branch
      %36 = sbr.rel (0) target = $region13
    $region12: #{tpu_custom_call.1} parent=1 // pred_region
      %s38 = ssub.s32 256, 256
      %39 = vsyncadd [#allocation6], %s38
      %s40 = sshll.u32 [#allocation7], 4
      %s41 = int_to_ptr.vmem [resolvable:$true] %s40
      %46 = dma.hbm_to_vmem [thread:$0]  %s2, 256, %s41, [#allocation6], 128, 128, 8
    $region13: #{tpu_custom_call.1} parent=1 // pred_fallthru
      _
    // Predicated region
    $region14: #{tpu_custom_call.1} parent=1 // pred_check
      _
    $region15: #{tpu_custom_call.1} parent=1 // pred_check_branch
      %48 = sbr.rel (0) target = $region17
    $region16: #{tpu_custom_call.1} parent=1 // pred_region
      %49 = dma.done [#allocation3], 256
    $region17: #{tpu_custom_call.1} parent=1 // pred_fallthru
      _
    // Predicated region
    $region18: #{tpu_custom_call.1} parent=1 // pred_check
      _
    $region19: #{tpu_custom_call.1} parent=1 // pred_check_branch
      %51 = sbr.rel (0) target = $region21
    $region20: #{tpu_custom_call.1} parent=1 // pred_region
      %52 = dma.done [#allocation6], 256
    $region21: #{tpu_custom_call.1} parent=1 // pred_fallthru
      _
    // Predicated region
    $region22: #{tpu_custom_call.1} parent=1 // pred_check
      _
    $region23: #{tpu_custom_call.1} parent=1 // pred_check_branch
      %54 = sbr.rel (0) target = $region25
    $region24: #{tpu_custom_call.1} parent=1 // pred_region
      %55 = dma.done [#allocation6], 256
    $region25: #{tpu_custom_call.1} parent=1 // pred_fallthru
      _
    %v56 = vld [vmem:[#allocation2] sm:$0xff]
    %v57 = vld [vmem:[#allocation2 + $0x8] sm:$0xff]
    %v58 = vld [vmem:[#allocation5] sm:$0xff]
    %v59 = vld [vmem:[#allocation5 + $0x8] sm:$0xff]
    %v60 = vld [vmem:[#allocation7] sm:$0xff]
    %v61 = vld [vmem:[#allocation7 + $0x8] sm:$0xff]
    %v62 = vmax.f32 %v56, 0.0
    %v63 = vmax.f32 %v57, 0.0
    %v64 = vmul.f32 %v56, %v58
    %v65 = vmul.f32 %v57, %v59
    %v66 = vsub.f32 %v62, %v64
    %v67 = vsub.f32 %v63, %v65
    %v68 = vand.u32 2147483647, %v56
    %v69 = vand.u32 2147483647, %v57
    %v70 = vsub.f32 0.0, %v68
    %v71 = vsub.f32 0.0, %v69
    %v72 = vmul.f32 %v70, 1.442695
    %v73 = vpow.pop %v72
    %v74 = vmul.f32 %v71, 1.442695
    %v75 = vpow.pop %v74
    %v76 = vadd.f32 %v73, 1.0
    %v77 = vlog2.pop %v76
    %v78 = vmul.f32 %v77, 0.6931472
    %v79 = vmul.f32 -0.5, %v73
    %v80 = vadd.f32 %v79, 1.0
    %v81 = vmul.f32 %v80, %v73
    %v82 = vand.u32 2147483647, %v73
    %vm83 = vcmp.lt.f32.partialorder %v82, 0.0004427343
    %v84 = vsel %vm83, %v81, %v78
    %v85 = vadd.f32 %v75, 1.0
    %v86 = vlog2.pop %v85
    %v87 = vmul.f32 %v86, 0.6931472
    %v88 = vmul.f32 -0.5, %v75
    %v89 = vadd.f32 %v88, 1.0
    %v90 = vmul.f32 %v89, %v75
    %v91 = vand.u32 2147483647, %v75
    %vm92 = vcmp.lt.f32.partialorder %v91, 0.0004427343
    %v93 = vsel %vm92, %v90, %v87
    %v94 = vadd.f32 %v66, %v84
    %v95 = vadd.f32 %v67, %v93
    %v96 = vmul.f32 %v60, %v94
    %v97 = vmul.f32 %v61, %v95
    %v98 = vadd.f32 %v96, %v97
    %99 = vst [vmem:[#allocation8] sm:$0xff] %v98
    // Predicated region
    $region26: #{tpu_custom_call.1} parent=1 // pred_check
      _
    $region27: #{tpu_custom_call.1} parent=1 // pred_check_branch
      %101 = sbr.rel (0) target = $region29
    $region28: #{tpu_custom_call.1} parent=1 // pred_region
      %s103 = ssub.s32 128, 128
      %104 = vsyncadd [#allocation4], %s103
      %s106 = sshll.u32 [#allocation8], 4
      %s107 = int_to_ptr.vmem [resolvable:$true] %s106
      %109 = dma.vmem_to_hbm [thread:$0]  %s107, 128, %s3, [#allocation4]
    $region29: #{tpu_custom_call.1} parent=1 // pred_fallthru
      _
    // Predicated region
    $region30: #{tpu_custom_call.1} parent=1 // pred_check
      _
    $region31: #{tpu_custom_call.1} parent=1 // pred_check_branch
      %111 = sbr.rel (0) target = $region33
    $region32: #{tpu_custom_call.1} parent=1 // pred_region
      %112 = dma.done [#allocation4], 128
    $region33: #{tpu_custom_call.1} parent=1 // pred_fallthru
      _
    %113 = vsyncpa [#allocation3], 1
    %114 = vsyncpa [#allocation6], 1
    %115 = vsyncpa [#allocation4], 1

</llo_original>
